<compile_context>
chip_gen: v7x
topology: tpu7x:2x2x1
jax: 0.10.0
libtpu: 0.0.40
codegen_flags: <defaults>
</compile_context>

<pallas_src>
import math

import jax
import jax.numpy as jnp
import numpy as np
from jax.experimental import pallas as pl
from jax.experimental.pallas import tpu as pltpu


def glimpse_kernel(x_ref, wt_ref, b_ref, v_ref, o_ref):
    # x_ref : (Bt, L, D)   input encodings (f32 or bf16)
    # wt_ref: (D, U)       conv1d weight transposed to (in_ch, out_ch)
    # b_ref : (1, U)       conv1d bias (f32)
    # v_ref : (1, U)       scoring vector (f32)
    # o_ref : (Bt, D) or (Bt, 1, D)   per-sequence glimpse
    bt, l, d = x_ref.shape

    x = x_ref[...]                                     # (Bt, L, D)
    # Merge leading dims so the conv is one tall MXU matmul.  This is a free
    # sublane merge when L is a multiple of the sublane tile; for ragged L it
    # is a block-local (VMEM-only) relayout but still correct.
    xf = x.reshape(bt * l, d)                          # (Bt*L, D)

    # 1x1 Conv1d == pointwise linear; f32 accumulation on the MXU.
    enc = jnp.dot(xf, wt_ref[...], preferred_element_type=jnp.float32)
    enc = enc + b_ref[...]                             # (Bt*L, U) f32

    # scores = sum(v * tanh(encoded), -1): VPU multiply + lane (XLU) reduce.
    # (An N=1 MXU matmul would double the vmatmul pushes for negligible flops.)
    t = jnp.tanh(enc)                                  # EUP
    s = jnp.sum(t * v_ref[...], axis=-1, keepdims=True)           # (Bt*L, 1)
    s = s.reshape(bt, l, 1)                            # (Bt, L, 1)

    # TODO(synk): optional boolean `mask` (scores[mask] = -inf) not wired in;
    # the forward is implemented for mask=None (mask would be applied here).

    # Numerically-stable softmax over the sequence axis, per sequence.
    m = jnp.max(s, axis=1, keepdims=True)              # (Bt, 1, 1)
    e = jnp.exp(s - m)                                 # (Bt, L, 1)  EUP
    den = jnp.sum(e, axis=1, keepdims=True)            # (Bt, 1, 1)
    inv = pl.reciprocal(den, approx=True)              # EUP rcp (idle slot)
    inv = inv * (2.0 - den * inv)                      # Newton step -> f32 acc.
    attn = e * inv                                     # (Bt, L, 1) f32

    # glimpse[b] = sum_l attn[b, l] * x[b, l, :]  as a batched MXU matmul
    # (Bt, 1, L) @ (Bt, L, D) with f32 accumulation; x stays in its input
    # dtype (no block-sized f32 copy of x).
    attn_row = attn.reshape(bt, 1, l).astype(x.dtype)  # (Bt, 1, L)
    g = jnp.einsum("bql,bld->bqd", attn_row, x,
                   preferred_element_type=jnp.float32)             # (Bt, 1, D)
    o_ref[...] = g.reshape(o_ref.shape).astype(o_ref.dtype)


def _sublane_align(itemsize):
    return max(8, 32 // itemsize)          # f32: 8, bf16: 16, int8: 32


def _pick_block_batch(B, L, D, itemsize, *, max_rows=2048,
                      vmem_budget_bytes=8 << 20):
    """Pick the batch tile Bt.

    Largest Bt whose input block (Bt, L, D) fits an ~8 MiB per-buffer VMEM
    budget (double-buffer + f32 matmul intermediates stay under the 48 MiB
    scoped limit, i.e. also safe on v7x's 64 MiB VMEM) and whose Bt*L MXU row
    count stays <= max_rows.  Bt is kept a multiple of the sublane tile so the
    2-D (Bt, D) output block stores densely, and the grid is split to >= 2
    steps when B allows it so v7x can shard the batch axis across both cores.
    """
    align = _sublane_align(itemsize)
    row_bytes = max(1, L * D * itemsize)
    bt = min(B, max(1, vmem_budget_bytes // row_bytes), max(1, max_rows // L))
    if bt >= B:
        if B >= 2 * align:
            bt = max(align, (B // 2) // align * align)   # split for megacore
        else:
            bt = B                                       # single full block
    elif bt >= align:
        bt = (bt // align) * align                       # sublane-aligned tile
    return max(1, int(bt))


@jax.jit
def glimpse(encs, conv_w, conv_b, v):
    """encs: (B, L, d_model); conv_w: (d_unit, d_model); conv_b, v: (d_unit,)."""
    B, L, D = encs.shape
    U = v.shape[0]
    in_dtype = encs.dtype                      # stream activations as-is (bf16 ok)
    itemsize = jnp.dtype(in_dtype).itemsize

    Bt = _pick_block_batch(B, L, D, itemsize)
    num_blocks = pl.cdiv(B, Bt)                # ragged last block is masked

    # Lane/sublane-dense (Bt, D) output block when Bt is sublane aligned (or a
    # single full block); otherwise fall back to the always-legal (Bt, 1, D).
    dense_out = (Bt == B) or (Bt % _sublane_align(itemsize) == 0)
    if dense_out:
        out_shape = jax.ShapeDtypeStruct((B, D), in_dtype)
        out_spec = pl.BlockSpec((Bt, D), lambda i: (i, 0))
    else:
        out_shape = jax.ShapeDtypeStruct((B, 1, D), in_dtype)
        out_spec = pl.BlockSpec((Bt, 1, D), lambda i: (i, 0, 0))

    wt = conv_w.T.astype(in_dtype)             # (D, U) matmul operand
    b2 = conv_b.reshape(1, U).astype(jnp.float32)
    v2 = v.reshape(1, U).astype(jnp.float32)

    cost = pl.CostEstimate(
        flops=2 * B * L * D * U + 3 * B * L * U + 2 * B * L * D,
        transcendentals=B * L * U + B * L,
        bytes_accessed=(B * L * D * itemsize + D * U * itemsize
                        + 2 * U * 4 + B * D * itemsize),
    )

    out = pl.pallas_call(
        glimpse_kernel,
        out_shape=out_shape,
        grid_spec=pltpu.PrefetchScalarGridSpec(
            num_scalar_prefetch=0,
            grid=(num_blocks,),
            in_specs=[
                pl.BlockSpec((Bt, L, D), lambda i: (i, 0, 0)),
                pl.BlockSpec((D, U), lambda i: (0, 0)),
                pl.BlockSpec((1, U), lambda i: (0, 0)),
                pl.BlockSpec((1, U), lambda i: (0, 0)),
            ],
            out_specs=out_spec,
        ),
        compiler_params=pltpu.CompilerParams(
            # "parallel" is safe on all generations; on v7x the batch axis can
            # additionally use pltpu.CORE_PARALLEL if one TensorCore profiles
            # idle at long grids.
            dimension_semantics=("parallel",),
            vmem_limit_bytes=48 * 1024 * 1024,
        ),
        cost_estimate=cost,
    )(encs, wt, b2, v2)
    return out if dense_out else out[:, 0, :]


def glimpse_reference(encs, conv_w, conv_b, v):
    # Pure-JAX reference of the PyTorch forward (mask=None).
    encoded = jnp.einsum("bld,ud->blu", encs, conv_w) + conv_b     # (B, L, U)
    scores = jnp.sum(v * jnp.tanh(encoded), axis=-1)               # (B, L)
    attn = jax.nn.softmax(scores, axis=-1)                         # (B, L)
    return jnp.sum(attn[..., None] * encs, axis=1)                 # (B, D)


def _init_params(key, d_model, d_unit):
    # Deterministic parameter init mirroring nn.Conv1d / the uniform v init.
    k_w, k_b, k_v = jax.random.split(key, 3)
    bound_w = 1.0 / math.sqrt(d_model)         # conv1d fan_in = d_model * 1
    conv_w = jax.random.uniform(k_w, (d_unit, d_model), jnp.float32,
                                -bound_w, bound_w)
    conv_b = jax.random.uniform(k_b, (d_unit,), jnp.float32, -bound_w, bound_w)
    bound_v = 1.0 / math.sqrt(d_unit)
    v = jax.random.uniform(k_v, (d_unit,), jnp.float32, -bound_v, bound_v)
    return conv_w, conv_b, v


if __name__ == "__main__":
    key = jax.random.PRNGKey(0)

    # (B, L, d_model, d_unit, dtype, tol)
    cases = [
        (2, 8, 32, 32, jnp.float32, 1e-4),     # tiny baseline (single block)
        (20, 12, 64, 48, jnp.float32, 1e-4),   # aligned tiles + ragged grid + L%8!=0
        (4, 16, 128, 64, jnp.bfloat16, 6e-2),  # bf16 streaming path
    ]
    for B, L, d_model, d_unit, dtype, tol in cases:
        key, k_x, k_p = jax.random.split(key, 3)
        encs = jax.random.normal(k_x, (B, L, d_model), jnp.float32)
        conv_w, conv_b, v = _init_params(k_p, d_model, d_unit)

        out = glimpse(encs.astype(dtype), conv_w, conv_b, v)
        out = jax.block_until_ready(out)

        # Reference with the same activation/weight quantization as the kernel.
        ref = glimpse_reference(encs.astype(dtype).astype(jnp.float32),
                                conv_w.astype(dtype).astype(jnp.float32),
                                conv_b, v)
        np.testing.assert_allclose(np.asarray(out, dtype=np.float32),
                                   np.asarray(ref), rtol=tol, atol=tol)

    print("KERNEL_OK")
</pallas_src>

<mosaic_0001>
module attributes {stable_mosaic.version = 11 : i64} {
  func.func @glimpse_kernel(%arg0: i32, %arg1: memref<2x8x32xf32, #tpu.memory_space<vmem>>, %arg2: memref<32x32xf32, #tpu.memory_space<vmem>>, %arg3: memref<1x32xf32, #tpu.memory_space<vmem>>, %arg4: memref<1x32xf32, #tpu.memory_space<vmem>>, %arg5: memref<2x32xf32, #tpu.memory_space<vmem>>) attributes {dimension_semantics = [#tpu.dimension_semantics<parallel>], iteration_bounds = array<i64: 1>, scalar_prefetch = 0 : i64, scratch_operands = 0 : i64, tpu.core_type = #tpu.core_type<tc>, window_params = [{transform_indices = @transform_0, window_bounds = array<i64: 2, 8, 32>}, {pipeline_mode = #tpu.pipeline_mode<synchronous>, transform_indices = @transform_1, window_bounds = array<i64: 32, 32>}, {pipeline_mode = #tpu.pipeline_mode<synchronous>, transform_indices = @transform_2, window_bounds = array<i64: 1, 32>}, {pipeline_mode = #tpu.pipeline_mode<synchronous>, transform_indices = @transform_3, window_bounds = array<i64: 1, 32>}, {transform_indices = @transform_4, window_bounds = array<i64: 2, 32>}]} {
    %c0 = arith.constant 0 : index
    %c0_0 = arith.constant 0 : index
    %c0_1 = arith.constant 0 : index
    %0 = vector.load %arg1[%c0, %c0_0, %c0_1] : memref<2x8x32xf32, #tpu.memory_space<vmem>>, vector<2x8x32xf32>
    %1 = vector.shape_cast %0 : vector<2x8x32xf32> to vector<16x32xf32>
    %c0_2 = arith.constant 0 : index
    %c0_3 = arith.constant 0 : index
    %2 = vector.load %arg2[%c0_2, %c0_3] : memref<32x32xf32, #tpu.memory_space<vmem>>, vector<32x32xf32>
    %cst = arith.constant dense<0.000000e+00> : vector<16x32xf32>
    %3 = tpu.matmul %1, %2, %cst {dimension_numbers = #tpu.dot_dimension_numbers<[1], [0], [0], [1], [0, 0, 1, 1], [], []>} : vector<16x32xf32>, vector<32x32xf32>, vector<16x32xf32> -> vector<16x32xf32>
    %c0_4 = arith.constant 0 : index
    %c0_5 = arith.constant 0 : index
    %4 = vector.load %arg3[%c0_4, %c0_5] : memref<1x32xf32, #tpu.memory_space<vmem>>, vector<1x32xf32>
    %5 = vector.broadcast %4 : vector<1x32xf32> to vector<16x32xf32>
    %6 = arith.addf %3, %5 : vector<16x32xf32>
    %7 = math.tanh %6 : vector<16x32xf32>
    %c0_6 = arith.constant 0 : index
    %c0_7 = arith.constant 0 : index
    %8 = vector.load %arg4[%c0_6, %c0_7] : memref<1x32xf32, #tpu.memory_space<vmem>>, vector<1x32xf32>
    %9 = vector.broadcast %8 : vector<1x32xf32> to vector<16x32xf32>
    %10 = arith.mulf %7, %9 : vector<16x32xf32>
    %cst_8 = arith.constant dense<0.000000e+00> : vector<16xf32>
    %11 = vector.multi_reduction <add>, %10, %cst_8 [1] : vector<16x32xf32> to vector<16xf32>
    %12 = vector.shape_cast %11 : vector<16xf32> to vector<16x1xf32>
    %13 = vector.shape_cast %12 : vector<16x1xf32> to vector<2x8x1xf32>
    %cst_9 = arith.constant dense<0xFF800000> : vector<2x1xf32>
    %14 = vector.multi_reduction <maximumf>, %13, %cst_9 [1] : vector<2x8x1xf32> to vector<2x1xf32>
    %15 = vector.shape_cast %14 : vector<2x1xf32> to vector<2x1x1xf32>
    %16 = vector.broadcast %15 : vector<2x1x1xf32> to vector<2x8x1xf32>
    %17 = arith.subf %13, %16 : vector<2x8x1xf32>
    %18 = math.exp %17 : vector<2x8x1xf32>
    %cst_10 = arith.constant dense<0.000000e+00> : vector<2x1xf32>
    %19 = vector.multi_reduction <add>, %18, %cst_10 [1] : vector<2x8x1xf32> to vector<2x1xf32>
    %20 = vector.shape_cast %19 : vector<2x1xf32> to vector<2x1x1xf32>
    %21 = tpu.reciprocal %20 {approx = true} : vector<2x1x1xf32> -> vector<2x1x1xf32>
    %22 = arith.mulf %20, %21 : vector<2x1x1xf32>
    %cst_11 = arith.constant 2.000000e+00 : f32
    %23 = vector.broadcast %cst_11 : f32 to vector<2x1x1xf32>
    %24 = arith.subf %23, %22 : vector<2x1x1xf32>
    %25 = arith.mulf %21, %24 : vector<2x1x1xf32>
    %26 = vector.broadcast %25 : vector<2x1x1xf32> to vector<2x8x1xf32>
    %27 = arith.mulf %18, %26 : vector<2x8x1xf32>
    %28 = vector.shape_cast %27 : vector<2x8x1xf32> to vector<2x1x8xf32>
    "tpu.trace_start"() <{level = 10 : i32, message = "bql,bld->bqd"}> : () -> ()
    %cst_12 = arith.constant dense<0.000000e+00> : vector<2x1x32xf32>
    %29 = tpu.matmul %28, %0, %cst_12 {dimension_numbers = #tpu.dot_dimension_numbers<[2], [1], [1], [2], [0, 0, 0, 1, 1, 2], [0], [0]>} : vector<2x1x8xf32>, vector<2x8x32xf32>, vector<2x1x32xf32> -> vector<2x1x32xf32>
    "tpu.trace_stop"() : () -> ()
    %30 = vector.shape_cast %29 : vector<2x1x32xf32> to vector<2x32xf32>
    %c0_13 = arith.constant 0 : index
    %c0_14 = arith.constant 0 : index
    %31 = vector.load %arg5[%c0_13, %c0_14] : memref<2x32xf32, #tpu.memory_space<vmem>>, vector<2x32xf32>
    tpu.vector_store %arg5[%c0_13, %c0_14], %30 {strides = array<i32>} : memref<2x32xf32, #tpu.memory_space<vmem>>, vector<2x32xf32>,
    return
  }
  func.func @transform_0(%arg0: i32) -> (i32, i32, i32) {
    %c0_i32 = arith.constant 0 : i32
    %c0_i32_0 = arith.constant 0 : i32
    %c0_i32_1 = arith.constant 0 : i32
    return %arg0, %c0_i32, %c0_i32_0 : i32, i32, i32
  }
  func.func @transform_1(%arg0: i32) -> (i32, i32) {
    %c0_i32 = arith.constant 0 : i32
    %c0_i32_0 = arith.constant 0 : i32
    %c0_i32_1 = arith.constant 0 : i32
    return %c0_i32, %c0_i32_0 : i32, i32
  }
  func.func @transform_2(%arg0: i32) -> (i32, i32) {
    %c0_i32 = arith.constant 0 : i32
    %c0_i32_0 = arith.constant 0 : i32
    %c0_i32_1 = arith.constant 0 : i32
    return %c0_i32, %c0_i32_0 : i32, i32
  }
  func.func @transform_3(%arg0: i32) -> (i32, i32) {
    %c0_i32 = arith.constant 0 : i32
    %c0_i32_0 = arith.constant 0 : i32
    %c0_i32_1 = arith.constant 0 : i32
    return %c0_i32, %c0_i32_0 : i32, i32
  }
  func.func @transform_4(%arg0: i32) -> (i32, i32) {
    %c0_i32 = arith.constant 0 : i32
    %c0_i32_0 = arith.constant 0 : i32
    return %arg0, %c0_i32 : i32, i32
  }
}

</mosaic_0001>

<llo_original>
// kernel: glimpse.1
$region0: #{glimpse.1}
  #allocation0 [shape = 'u32[]', space=smem, size = 0x4, offset = 0x4, fixed_abs, tag = 'smem constant byte address 0x4 - core index']
  #allocation1 [shape = 'u32[144,128]{1,0:T(1,128)}', space=vmem, size = 0x12000, scoped, tag = 'internal scratch']
  %s0 = inlined_call_operand.vmem [shape: f32[2,8,32], index: 0, kind: input, shape index: {}]
  %s1 = inlined_call_operand.vmem [shape: f32[32,32], index: 1, kind: input, shape index: {}]
  %s2 = inlined_call_operand.vmem [shape: f32[1,32], index: 2, kind: input, shape index: {}]
  %s3 = inlined_call_operand.vmem [shape: f32[1,32], index: 3, kind: input, shape index: {}]
  %s4 = inlined_call_operand.hbm [shape: f32[2,32], index: 4, kind: output, shape index: {}]
  %s5 = sld [smem:[#allocation0]]
  $region26: #{glimpse.1} parent=0
    _
  %s7 = ssub.s32 1, %s5
  %s8 = scalar_select 0, %s7, %s5
  $region1: #{glimpse.1} parent=0
    #allocation2 [shape = 'u8[1024]{0}', space=vmem, size = 0x400, scoped, tag = 'output window, operand 0, single buffered']
    #allocation3 [shape = 's32[1]{0}', space=sflag, size = 0x4, scoped, tag = 'scoped memory for glimpse.1']
    %9 = vsyncpa [#allocation3], 0
    // Predicated region
    $region2: #{glimpse.1} parent=1 // pred_check
      _
    $region3: #{glimpse.1} parent=1 // pred_check_branch
      %11 = sbr.rel (0) target = $region5
    $region4: #{glimpse.1} parent=1 // pred_region
      _
    $region5: #{glimpse.1} parent=1 // pred_fallthru
      _
    // Predicated region
    $region6: #{glimpse.1} parent=1 // pred_check
      _
    $region7: #{glimpse.1} parent=1 // pred_check_branch
      %13 = sbr.rel (0) target = $region9
    $region8: #{glimpse.1} parent=1 // pred_region
      _
    $region9: #{glimpse.1} parent=1 // pred_fallthru
      _
    // Predicated region
    $region10: #{glimpse.1} parent=1 // pred_check
      _
    $region11: #{glimpse.1} parent=1 // pred_check_branch
      %15 = sbr.rel (0) target = $region13
    $region12: #{glimpse.1} parent=1 // pred_region
      _
    $region13: #{glimpse.1} parent=1 // pred_fallthru
      _
    // Predicated region
    $region14: #{glimpse.1} parent=1 // pred_check
      _
    $region15: #{glimpse.1} parent=1 // pred_check_branch
      %17 = sbr.rel (0) target = $region17
    $region16: #{glimpse.1} parent=1 // pred_region
      _
    $region17: #{glimpse.1} parent=1 // pred_fallthru
      _
    %v18 = vld [vmem:[%s0] sm:$0xff]
    %v19 = vld [vmem:[%s0 + $0x8] sm:$0xff]
    %v20 = vld [vmem:[%s1] sm:$0xff]
    %v21 = vld [vmem:[%s1 + $0x8] sm:$0xff]
    %v22 = vld [vmem:[%s1 + $0x10] sm:$0xff]
    %v23 = vld [vmem:[%s1 + $0x18] sm:$0xff]
    %v24 = vld [vmem:[%s2] sm:$0x1]
    %v26 = vlaneseq
    %v27 = vshrl.u32 %v26, 7
    %v28 = vsub.s32 0, %v27
    %v29 = vrot.slane %v24, %v28
    %vm31 = vcmask 261120
    %v33 = vsel %vm31, %v18, 0
    %v36 = vsel %vm31, %v19, 0
    %38 = vmatprep.subr.mxu0 0.0
    %39 = vmatpush1.msra.mxu0 %v20
    %40 = vmatprep.subr.mxu0 0.0
    %41 = vmatpush1.msra.mxu0 %v21
    %42 = vmatprep.subr.mxu0 0.0
    %43 = vmatpush1.msra.mxu0 %v22
    %44 = vmatprep.subr.mxu0 0.0
    %45 = vmatpush1.msra.mxu0 %v23
    %46 = vmatprep.subr.mxu0 0.0
    %47 = vmatpush1.msra.mxu0 0.0
    %48 = vmatprep.subr.mxu0 0.0
    %49 = vmatpush1.msra.mxu0 0.0
    %50 = vmatprep.subr.mxu0 0.0
    %51 = vmatpush1.msra.mxu0 0.0
    %52 = vmatprep.subr.mxu0 0.0
    %53 = vmatpush1.msra.mxu0 0.0
    %54 = vmatprep.subr.mxu0 0.0
    %55 = vmatpush1.msra.mxu0 0.0
    %56 = vmatprep.subr.mxu0 0.0
    %57 = vmatpush1.msra.mxu0 0.0
    %58 = vmatprep.subr.mxu0 0.0
    %59 = vmatpush1.msra.mxu0 0.0
    %60 = vmatprep.subr.mxu0 0.0
    %61 = vmatpush1.msra.mxu0 0.0
    %62 = vmatprep.subr.mxu0 0.0
    %63 = vmatpush1.msra.mxu0 0.0
    %64 = vmatprep.subr.mxu0 0.0
    %65 = vmatpush1.msra.mxu0 0.0
    %66 = vmatprep.subr.mxu0 0.0
    %67 = vmatpush1.msra.mxu0 0.0
    %68 = vmatprep.subr.mxu0 0.0
    %69 = vmatpush1.msra.mxu0 0.0
    %70 = vmatprep.subr.mxu0 0.0
    %71 = vmatpush1.msra.mxu0 0.0
    %72 = vmatprep.subr.mxu0 0.0
    %73 = vmatpush1.msra.mxu0 0.0
    %74 = vmatprep.subr.mxu0 0.0
    %75 = vmatpush1.msra.mxu0 0.0
    %76 = vmatprep.subr.mxu0 0.0
    %77 = vmatpush1.msra.mxu0 0.0
    %78 = vmatprep.subr.mxu0 0.0
    %79 = vmatpush1.msra.mxu0 0.0
    %80 = vmatprep.subr.mxu0 0.0
    %81 = vmatpush1.msra.mxu0 0.0
    %82 = vmatprep.subr.mxu0 0.0
    %83 = vmatpush1.msra.mxu0 0.0
    %84 = vmatprep.subr.mxu0 0.0
    %85 = vmatpush1.msra.mxu0 0.0
    %86 = vmatprep.subr.mxu0 0.0
    %87 = vmatpush1.msra.mxu0 0.0
    %88 = vmatprep.subr.mxu0 0.0
    %89 = vmatpush1.msra.mxu0 0.0
    %90 = vmatprep.subr.mxu0 0.0
    %91 = vmatpush1.msra.mxu0 0.0
    %92 = vmatprep.subr.mxu0 0.0
    %93 = vmatpush1.msra.mxu0 0.0
    %94 = vmatprep.subr.mxu0 0.0
    %95 = vmatpush1.msra.mxu0 0.0
    %96 = vmatprep.subr.mxu0 0.0
    %97 = vmatpush1.msra.mxu0 0.0
    %98 = vmatprep.subr.mxu0 0.0
    %99 = vmatpush1.msra.mxu0 0.0
    %100 = vmatprep.subr.mxu0 0.0
    %101 = vmatpush1.msra.mxu0 0.0
    %102 = vmatprep.mubr.f32.mxu0 0.0
    %103 = vmatmul.mubr.f32.gmra.mrb[0].mxu0 %v33
    %v104 = vpop.f32.mrb[0].mxu0
    %v105 = vadd.f32 %v29, %v104
    %v106 = vpop.f32.mrb[0].mxu0
    %107 = vmatprep.mubr.f32.mxu0 0.0
    %108 = vmatmul.mubr.f32.gmra.mrb[0].mxu0 %v36
    %v109 = vpop.f32.mrb[0].mxu0
    %v110 = vadd.f32 %v29, %v109
    %v111 = vpop.f32.mrb[0].mxu0
    %112 = vdwg.mxu0
    %v113 = vtanh.pop %v105
    %v114 = vtanh.pop %v110
    %v115 = vld [vmem:[%s3] sm:$0x1]
    %v117 = vlaneseq
    %v118 = vshrl.u32 %v117, 7
    %v119 = vsub.s32 0, %v118
    %v120 = vrot.slane %v115, %v119
    %v122 = vmul.f32 %v113, %v120
    %v123 = vmul.f32 %v114, %v120
    %v124 = vsel %vm31, %v122, 0.0
    %125 = vadd.xlane.f32.xlu0 %v124
    %v126 = vpop.xlane.xlu0 %125
    %v127 = vsel %vm31, %v123, 0.0
    %128 = vadd.xlane.f32.xlu0 %v127
    %v129 = vpop.xlane.xlu0 %128
    %v130 = vrot.slane %v126, 4
    %v131 = vmax.f32 %v126, %v130
    %v132 = vrot.slane %v131, 2
    %v133 = vmax.f32 %v131, %v132
    %v134 = vrot.slane %v133, 1
    %v135 = vmax.f32 %v133, %v134
    %v136 = vrot.slane %v129, 4
    %v137 = vmax.f32 %v129, %v136
    %v138 = vrot.slane %v137, 2
    %v139 = vmax.f32 %v137, %v138
    %v140 = vrot.slane %v139, 1
    %v141 = vmax.f32 %v139, %v140
    %v142 = vsub.f32 %v126, %v135
    %v143 = vsub.f32 %v129, %v141
    %v144 = vmul.f32 %v142, 1.442695
    %v145 = vpow.pop %v144
    %v146 = vmul.f32 %v143, 1.442695
    %v147 = vpow.pop %v146
    %v148 = vrot.slane %v145, 4
    %v149 = vadd.f32 %v145, %v148
    %v150 = vrot.slane %v149, 2
    %v151 = vadd.f32 %v149, %v150
    %v152 = vrot.slane %v151, 1
    %v153 = vadd.f32 %v151, %v152
    %v154 = vrot.slane %v147, 4
    %v155 = vadd.f32 %v147, %v154
    %v156 = vrot.slane %v155, 2
    %v157 = vadd.f32 %v155, %v156
    %v158 = vrot.slane %v157, 1
    %v159 = vadd.f32 %v157, %v158
    %v160 = vrcp.pop %v153
    %v161 = vrcp.pop %v159
    %v162 = vmul.f32 %v153, %v160
    %v163 = vmul.f32 %v159, %v161
    %v164 = vsub.f32 2.0, %v162
    %v165 = vsub.f32 2.0, %v163
    %v166 = vmul.f32 %v160, %v164
    %v167 = vmul.f32 %v161, %v165
    %v168 = vmul.f32 %v145, %v166
    %v169 = vmul.f32 %v147, %v167
    %v171 = vlaneseq
    %v172 = vand.u32 %v171, 127
    %v173 = vlaneseq
    %v174 = vshrl.u32 %v173, 7
    %v175 = vsub.s32 %v172, %v174
    %v176 = vrot.slane %v168, %v175
    %vm177 = vcmask 64512
    %v178 = vsel %vm177, %v176, 0
    %180 = vmatprep.subr.mxu0 0.0
    %181 = vmatpush1.msra.mxu0 %v18
    %182 = vmatprep.subr.mxu0 0.0
    %183 = vmatpush1.msra.mxu0 0.0
    %184 = vmatprep.subr.mxu0 0.0
    %185 = vmatpush1.msra.mxu0 0.0
    %186 = vmatprep.subr.mxu0 0.0
    %187 = vmatpush1.msra.mxu0 0.0
    %188 = vmatprep.subr.mxu0 0.0
    %189 = vmatpush1.msra.mxu0 0.0
    %190 = vmatprep.subr.mxu0 0.0
    %191 = vmatpush1.msra.mxu0 0.0
    %192 = vmatprep.subr.mxu0 0.0
    %193 = vmatpush1.msra.mxu0 0.0
    %194 = vmatprep.subr.mxu0 0.0
    %195 = vmatpush1.msra.mxu0 0.0
    %196 = vmatprep.subr.mxu0 0.0
    %197 = vmatpush1.msra.mxu0 0.0
    %198 = vmatprep.subr.mxu0 0.0
    %199 = vmatpush1.msra.mxu0 0.0
    %200 = vmatprep.subr.mxu0 0.0
    %201 = vmatpush1.msra.mxu0 0.0
    %202 = vmatprep.subr.mxu0 0.0
    %203 = vmatpush1.msra.mxu0 0.0
    %204 = vmatprep.subr.mxu0 0.0
    %205 = vmatpush1.msra.mxu0 0.0
    %206 = vmatprep.subr.mxu0 0.0
    %207 = vmatpush1.msra.mxu0 0.0
    %208 = vmatprep.subr.mxu0 0.0
    %209 = vmatpush1.msra.mxu0 0.0
    %210 = vmatprep.subr.mxu0 0.0
    %211 = vmatpush1.msra.mxu0 0.0
    %212 = vmatprep.subr.mxu0 0.0
    %213 = vmatpush1.msra.mxu0 0.0
    %214 = vmatprep.subr.mxu0 0.0
    %215 = vmatpush1.msra.mxu0 0.0
    %216 = vmatprep.subr.mxu0 0.0
    %217 = vmatpush1.msra.mxu0 0.0
    %218 = vmatprep.subr.mxu0 0.0
    %219 = vmatpush1.msra.mxu0 0.0
    %220 = vmatprep.subr.mxu0 0.0
    %221 = vmatpush1.msra.mxu0 0.0
    %222 = vmatprep.subr.mxu0 0.0
    %223 = vmatpush1.msra.mxu0 0.0
    %224 = vmatprep.subr.mxu0 0.0
    %225 = vmatpush1.msra.mxu0 0.0
    %226 = vmatprep.subr.mxu0 0.0
    %227 = vmatpush1.msra.mxu0 0.0
    %228 = vmatprep.subr.mxu0 0.0
    %229 = vmatpush1.msra.mxu0 0.0
    %230 = vmatprep.subr.mxu0 0.0
    %231 = vmatpush1.msra.mxu0 0.0
    %232 = vmatprep.subr.mxu0 0.0
    %233 = vmatpush1.msra.mxu0 0.0
    %234 = vmatprep.subr.mxu0 0.0
    %235 = vmatpush1.msra.mxu0 0.0
    %236 = vmatprep.subr.mxu0 0.0
    %237 = vmatpush1.msra.mxu0 0.0
    %238 = vmatprep.subr.mxu0 0.0
    %239 = vmatpush1.msra.mxu0 0.0
    %240 = vmatprep.subr.mxu0 0.0
    %241 = vmatpush1.msra.mxu0 0.0
    %242 = vmatprep.subr.mxu0 0.0
    %243 = vmatpush1.msra.mxu0 0.0
    %244 = vmatprep.mubr.f32.mxu0 0.0
    %245 = vmatmul.mubr.f32.gmra.mrb[0].mxu0 %v178
    %v246 = vpop.f32.mrb[0].mxu0
    %v247 = vadd.f32 0.0, %v246
    %v248 = vpop.f32.mrb[0].mxu0
    %249 = vdwg.mxu0
    %v251 = vlaneseq
    %v252 = vshrl.u32 %v251, 7
    %v253 = vsub.s32 %v172, %v252
    %v254 = vrot.slane %v169, %v253
    %v255 = vsel %vm177, %v254, 0
    %257 = vmatprep.subr.mxu0 0.0
    %258 = vmatpush1.msra.mxu0 %v19
    %259 = vmatprep.subr.mxu0 0.0
    %260 = vmatpush1.msra.mxu0 0.0
    %261 = vmatprep.subr.mxu0 0.0
    %262 = vmatpush1.msra.mxu0 0.0
    %263 = vmatprep.subr.mxu0 0.0
    %264 = vmatpush1.msra.mxu0 0.0
    %265 = vmatprep.subr.mxu0 0.0
    %266 = vmatpush1.msra.mxu0 0.0
    %267 = vmatprep.subr.mxu0 0.0
    %268 = vmatpush1.msra.mxu0 0.0
    %269 = vmatprep.subr.mxu0 0.0
    %270 = vmatpush1.msra.mxu0 0.0
    %271 = vmatprep.subr.mxu0 0.0
    %272 = vmatpush1.msra.mxu0 0.0
    %273 = vmatprep.subr.mxu0 0.0
    %274 = vmatpush1.msra.mxu0 0.0
    %275 = vmatprep.subr.mxu0 0.0
    %276 = vmatpush1.msra.mxu0 0.0
    %277 = vmatprep.subr.mxu0 0.0
    %278 = vmatpush1.msra.mxu0 0.0
    %279 = vmatprep.subr.mxu0 0.0
    %280 = vmatpush1.msra.mxu0 0.0
    %281 = vmatprep.subr.mxu0 0.0
    %282 = vmatpush1.msra.mxu0 0.0
    %283 = vmatprep.subr.mxu0 0.0
    %284 = vmatpush1.msra.mxu0 0.0
    %285 = vmatprep.subr.mxu0 0.0
    %286 = vmatpush1.msra.mxu0 0.0
    %287 = vmatprep.subr.mxu0 0.0
    %288 = vmatpush1.msra.mxu0 0.0
    %289 = vmatprep.subr.mxu0 0.0
    %290 = vmatpush1.msra.mxu0 0.0
    %291 = vmatprep.subr.mxu0 0.0
    %292 = vmatpush1.msra.mxu0 0.0
    %293 = vmatprep.subr.mxu0 0.0
    %294 = vmatpush1.msra.mxu0 0.0
    %295 = vmatprep.subr.mxu0 0.0
    %296 = vmatpush1.msra.mxu0 0.0
    %297 = vmatprep.subr.mxu0 0.0
    %298 = vmatpush1.msra.mxu0 0.0
    %299 = vmatprep.subr.mxu0 0.0
    %300 = vmatpush1.msra.mxu0 0.0
    %301 = vmatprep.subr.mxu0 0.0
    %302 = vmatpush1.msra.mxu0 0.0
    %303 = vmatprep.subr.mxu0 0.0
    %304 = vmatpush1.msra.mxu0 0.0
    %305 = vmatprep.subr.mxu0 0.0
    %306 = vmatpush1.msra.mxu0 0.0
    %307 = vmatprep.subr.mxu0 0.0
    %308 = vmatpush1.msra.mxu0 0.0
    %309 = vmatprep.subr.mxu0 0.0
    %310 = vmatpush1.msra.mxu0 0.0
    %311 = vmatprep.subr.mxu0 0.0
    %312 = vmatpush1.msra.mxu0 0.0
    %313 = vmatprep.subr.mxu0 0.0
    %314 = vmatpush1.msra.mxu0 0.0
    %315 = vmatprep.subr.mxu0 0.0
    %316 = vmatpush1.msra.mxu0 0.0
    %317 = vmatprep.subr.mxu0 0.0
    %318 = vmatpush1.msra.mxu0 0.0
    %319 = vmatprep.subr.mxu0 0.0
    %320 = vmatpush1.msra.mxu0 0.0
    %321 = vmatprep.mubr.f32.mxu0 0.0
    %322 = vmatmul.mubr.f32.gmra.mrb[0].mxu0 %v255
    %v323 = vpop.f32.mrb[0].mxu0
    %v324 = vadd.f32 0.0, %v323
    %v325 = vpop.f32.mrb[0].mxu0
    %326 = vdwg.mxu0
    %v329 = vrot.slane %v324, 7
    %vm330 = vcmask 1041409
    %v331 = vsel %vm330, %v329, %v247
    %vm333 = vcmask 254976
    %334 = vst.msk [vmem:[#allocation2] sm:$0x3] %vm333, %v331
    // Predicated region
    $region18: #{glimpse.1} parent=1 // pred_check
      _
    $region19: #{glimpse.1} parent=1 // pred_check_branch
      %336 = sbr.rel (0) target = $region21
    $region20: #{glimpse.1} parent=1 // pred_region
      %s338 = ssub.s32 32, 32
      %339 = vsyncadd [#allocation3], %s338
      %s341 = sshll.u32 [#allocation2], 4
      %s342 = int_to_ptr.vmem [resolvable:$true] %s341
      %344 = dma.vmem_to_hbm [thread:$0]  %s342, 32, %s4, [#allocation3]
    $region21: #{glimpse.1} parent=1 // pred_fallthru
      _
    // Predicated region
    $region22: #{glimpse.1} parent=1 // pred_check
      _
    $region23: #{glimpse.1} parent=1 // pred_check_branch
      %346 = sbr.rel (0) target = $region25
    $region24: #{glimpse.1} parent=1 // pred_region
      %347 = dma.done [#allocation3], 32
    $region25: #{glimpse.1} parent=1 // pred_fallthru
      _
    %348 = vsyncpa [#allocation3], 1

</llo_original>
